<compile_context>
chip_gen: v7x
topology: tpu7x:2x2x1
jax: 0.10.0
libtpu: 0.0.40
codegen_flags: <defaults>
</compile_context>

<pallas_src>
import jax
import jax.numpy as jnp
from jax.experimental import pallas as pl
from jax.experimental.pallas import tpu as pltpu


def pants_vae_kernel(x_ref, w_ref, b_ref, rand_ref, out_ref):
    """One batch tile.

    x_ref    : [tb, in]       activations
    w_ref    : [in, 2*out]    fused (mu | sigma) weights
    b_ref    : [1, 2*out]     fused biases
    rand_ref : [tb, out]      standard-normal noise
    out_ref  : [tb, 2*out]    fused (encoded | KL) output
    """
    out_f = rand_ref.shape[-1]

    # Single fused MXU pass for both branches (shared LHS), f32 accumulation.
    h = jnp.dot(x_ref[...], w_ref[...], preferred_element_type=jnp.float32)
    h = jnp.maximum(h + b_ref[...], 0.0)  # ReLU nonlinearity on both halves

    mu = h[:, :out_f]
    log_sigma = h[:, out_f:]
    sigma = jnp.exp(log_sigma)

    # Reparameterization trick.
    encoded = rand_ref[...] * sigma + mu

    # KL: log(sigma) == log_sigma exactly (sigma = exp(log_sigma)); skip the log.
    kl = sigma * sigma + mu * mu - log_sigma - 0.5

    # Lane-dense fused output slab; split back into (encoded, KL) in the wrapper.
    out_ref[...] = jnp.concatenate([encoded, kl], axis=-1)


def pants_vae_forward(x, w_mu, b_mu, w_sig, b_sig, rand, *, block_b=512):
    """x: [B, in] f32; w_*: [in, out] (pre-transposed from torch's [out, in]);
    b_*: [out]; rand: [B, out] ~ N(0, 1).  Returns (encoded, KL), each [B, out]."""
    B, in_features = x.shape
    out_features = w_mu.shape[1]
    two_out = 2 * out_features

    # Fuse the two Linear layers into one RHS / bias (done once, outside the grid).
    w_cat = jnp.concatenate([w_mu, w_sig], axis=1)              # [in, 2*out]
    b_cat = jnp.concatenate([b_mu, b_sig]).reshape(1, two_out)  # [1, 2*out]

    tile_b = min(block_b, B)
    grid = (pl.cdiv(B, tile_b),)

    fused = pl.pallas_call(
        pants_vae_kernel,
        out_shape=jax.ShapeDtypeStruct((B, two_out), jnp.float32),
        grid_spec=pltpu.PrefetchScalarGridSpec(
            num_scalar_prefetch=0,
            grid=grid,
            in_specs=[
                pl.BlockSpec((tile_b, in_features), lambda i: (i, 0)),    # x
                pl.BlockSpec((in_features, two_out), lambda i: (0, 0)),   # fused W
                pl.BlockSpec((1, two_out), lambda i: (0, 0)),             # fused b
                pl.BlockSpec((tile_b, out_features), lambda i: (i, 0)),   # rand
            ],
            out_specs=pl.BlockSpec((tile_b, two_out), lambda i: (i, 0)),
        ),
        compiler_params=pltpu.CompilerParams(
            dimension_semantics=("parallel",)),
    )(x, w_cat, b_cat, rand)

    encoded = fused[:, :out_features]
    kl = fused[:, out_features:]
    return encoded, kl


if __name__ == "__main__":
    B = 128
    in_features = 32
    out_features = 32

    key = jax.random.PRNGKey(0)
    k_x, k_wm, k_bm, k_ws, k_bs, k_r = jax.random.split(key, 6)

    # Deterministic parameter init (uniform(-1/sqrt(in), 1/sqrt(in)), like torch Linear).
    bound = 1.0 / jnp.sqrt(jnp.float32(in_features))
    w_mu = jax.random.uniform(k_wm, (in_features, out_features), jnp.float32,
                              -bound, bound)
    b_mu = jax.random.uniform(k_bm, (out_features,), jnp.float32, -bound, bound)
    w_sig = jax.random.uniform(k_ws, (in_features, out_features), jnp.float32,
                               -bound, bound)
    b_sig = jax.random.uniform(k_bs, (out_features,), jnp.float32, -bound, bound)

    x = jax.random.normal(k_x, (B, in_features), jnp.float32)
    rand = jax.random.normal(k_r, (B, out_features), jnp.float32)  # torch.randn

    # block_b=64 -> grid of 2 steps, exercising the batch-tiled pipeline.
    encoded, kl = pants_vae_forward(x, w_mu, b_mu, w_sig, b_sig, rand, block_b=64)
    jax.block_until_ready((encoded, kl))

    # Pure-JAX reference check of the forward semantics.
    mu_ref = jnp.maximum(x @ w_mu + b_mu, 0.0)
    log_sigma_ref = jnp.maximum(x @ w_sig + b_sig, 0.0)
    sigma_ref = jnp.exp(log_sigma_ref)
    enc_ref = rand * sigma_ref + mu_ref
    kl_ref = sigma_ref ** 2 + mu_ref ** 2 - jnp.log(sigma_ref) - 0.5
    assert jnp.allclose(encoded, enc_ref, atol=1e-5, rtol=1e-5)
    assert jnp.allclose(kl, kl_ref, atol=1e-5, rtol=1e-5)

    print("KERNEL_OK")
</pallas_src>

<mosaic_0001>
module attributes {stable_mosaic.version = 11 : i64} {
  func.func @pants_vae_kernel(%arg0: i32, %arg1: memref<64x32xf32, #tpu.memory_space<vmem>>, %arg2: memref<32x64xf32, #tpu.memory_space<vmem>>, %arg3: memref<1x64xf32, #tpu.memory_space<vmem>>, %arg4: memref<64x32xf32, #tpu.memory_space<vmem>>, %arg5: memref<64x64xf32, #tpu.memory_space<vmem>>) attributes {dimension_semantics = [#tpu.dimension_semantics<parallel>], iteration_bounds = array<i64: 2>, scalar_prefetch = 0 : i64, scratch_operands = 0 : i64, tpu.core_type = #tpu.core_type<tc>, window_params = [{transform_indices = @transform_0, window_bounds = array<i64: 64, 32>}, {pipeline_mode = #tpu.pipeline_mode<synchronous>, transform_indices = @transform_1, window_bounds = array<i64: 32, 64>}, {pipeline_mode = #tpu.pipeline_mode<synchronous>, transform_indices = @transform_2, window_bounds = array<i64: 1, 64>}, {transform_indices = @transform_3, window_bounds = array<i64: 64, 32>}, {transform_indices = @transform_4, window_bounds = array<i64: 64, 64>}]} {
    %c0 = arith.constant 0 : index
    %c0_0 = arith.constant 0 : index
    %0 = vector.load %arg1[%c0, %c0_0] : memref<64x32xf32, #tpu.memory_space<vmem>>, vector<64x32xf32>
    %c0_1 = arith.constant 0 : index
    %c0_2 = arith.constant 0 : index
    %1 = vector.load %arg2[%c0_1, %c0_2] : memref<32x64xf32, #tpu.memory_space<vmem>>, vector<32x64xf32>
    %cst = arith.constant dense<0.000000e+00> : vector<64x64xf32>
    %2 = tpu.matmul %0, %1, %cst {dimension_numbers = #tpu.dot_dimension_numbers<[1], [0], [0], [1], [0, 0, 1, 1], [], []>} : vector<64x32xf32>, vector<32x64xf32>, vector<64x64xf32> -> vector<64x64xf32>
    %c0_3 = arith.constant 0 : index
    %c0_4 = arith.constant 0 : index
    %3 = vector.load %arg3[%c0_3, %c0_4] : memref<1x64xf32, #tpu.memory_space<vmem>>, vector<1x64xf32>
    %4 = vector.broadcast %3 : vector<1x64xf32> to vector<64x64xf32>
    %5 = arith.addf %2, %4 : vector<64x64xf32>
    %cst_5 = arith.constant 0.000000e+00 : f32
    %6 = vector.broadcast %cst_5 : f32 to vector<64x64xf32>
    %7 = arith.maximumf %5, %6 : vector<64x64xf32>
    %8 = vector.extract_strided_slice %7 {offsets = [0, 0], sizes = [64, 32], strides = [1, 1]} : vector<64x64xf32> to vector<64x32xf32>
    %9 = vector.extract_strided_slice %7 {offsets = [0, 32], sizes = [64, 32], strides = [1, 1]} : vector<64x64xf32> to vector<64x32xf32>
    %10 = math.exp %9 : vector<64x32xf32>
    %c0_6 = arith.constant 0 : index
    %c0_7 = arith.constant 0 : index
    %11 = vector.load %arg4[%c0_6, %c0_7] : memref<64x32xf32, #tpu.memory_space<vmem>>, vector<64x32xf32>
    %12 = arith.mulf %11, %10 : vector<64x32xf32>
    %13 = arith.addf %12, %8 : vector<64x32xf32>
    %14 = arith.mulf %10, %10 : vector<64x32xf32>
    %15 = arith.mulf %8, %8 : vector<64x32xf32>
    %16 = arith.addf %14, %15 : vector<64x32xf32>
    %17 = arith.subf %16, %9 : vector<64x32xf32>
    %cst_8 = arith.constant 5.000000e-01 : f32
    %18 = vector.broadcast %cst_8 : f32 to vector<64x32xf32>
    %19 = arith.subf %17, %18 : vector<64x32xf32>
    %20 = tpu.concatenate %13, %19 in 1 : vector<64x32xf32>, vector<64x32xf32> -> vector<64x64xf32>
    %c0_9 = arith.constant 0 : index
    %c0_10 = arith.constant 0 : index
    %21 = vector.load %arg5[%c0_9, %c0_10] : memref<64x64xf32, #tpu.memory_space<vmem>>, vector<64x64xf32>
    tpu.vector_store %arg5[%c0_9, %c0_10], %20 {strides = array<i32>} : memref<64x64xf32, #tpu.memory_space<vmem>>, vector<64x64xf32>,
    return
  }
  func.func @transform_0(%arg0: i32) -> (i32, i32) {
    %c0_i32 = arith.constant 0 : i32
    %c0_i32_0 = arith.constant 0 : i32
    return %arg0, %c0_i32 : i32, i32
  }
  func.func @transform_1(%arg0: i32) -> (i32, i32) {
    %c0_i32 = arith.constant 0 : i32
    %c0_i32_0 = arith.constant 0 : i32
    %c0_i32_1 = arith.constant 0 : i32
    return %c0_i32, %c0_i32_0 : i32, i32
  }
  func.func @transform_2(%arg0: i32) -> (i32, i32) {
    %c0_i32 = arith.constant 0 : i32
    %c0_i32_0 = arith.constant 0 : i32
    %c0_i32_1 = arith.constant 0 : i32
    return %c0_i32, %c0_i32_0 : i32, i32
  }
  func.func @transform_3(%arg0: i32) -> (i32, i32) {
    %c0_i32 = arith.constant 0 : i32
    %c0_i32_0 = arith.constant 0 : i32
    return %arg0, %c0_i32 : i32, i32
  }
  func.func @transform_4(%arg0: i32) -> (i32, i32) {
    %c0_i32 = arith.constant 0 : i32
    %c0_i32_0 = arith.constant 0 : i32
    return %arg0, %c0_i32 : i32, i32
  }
}

</mosaic_0001>

<llo_original>
// kernel: tpu_custom_call.1
$region0: #{tpu_custom_call.1}
  #allocation0 [shape = 'u32[]', space=smem, size = 0x4, offset = 0x4, fixed_abs, tag = 'smem constant byte address 0x4 - core index']
  #allocation1 [shape = 'u32[144,128]{1,0:T(1,128)}', space=vmem, size = 0x12000, scoped, tag = 'internal scratch']
  %s0 = inlined_call_operand.vmem [shape: f32[128,32], index: 0, kind: input, shape index: {}]
  %s1 = inlined_call_operand.vmem [shape: f32[32,64], index: 1, kind: input, shape index: {}]
  %s2 = inlined_call_operand.vmem [shape: f32[1,64], index: 2, kind: input, shape index: {}]
  %s3 = inlined_call_operand.vmem [shape: f32[128,32], index: 3, kind: input, shape index: {}]
  %s4 = inlined_call_operand.vmem [shape: f32[128,64], index: 4, kind: output, shape index: {}]
  %s5 = sld [smem:[#allocation0]]
  $region49: #{tpu_custom_call.1} parent=0
    _
  %s7 = ssub.s32 1, %s5
  %s8 = scalar_select 0, %s7, %s5
  loop: start=0, step=1, limit=4
  $region2: #{tpu_custom_call.1} parent=0 // loop_pre_header
    _
  $region3: #{tpu_custom_call.1} parent=0 // loop_header
    %s10 = sphi 0, %s14
    %p11 = scmp.ge.s32.totalorder %s10, 4
    %s20 = sphi 0, %s22
    %s23 = sphi 0, %s20
    %s24 = sphi 0, %s23
    %s40 = sphi 0, %s24
    %s44 = sphi 0, %s44
    %s46 = sphi 0, %s44
    %s47 = sphi 0, %s46
    %s61 = sphi 0, %s47
    %s65 = sphi 0, %s65
    %s67 = sphi 0, %s65
    %s68 = sphi 0, %s67
    %s82 = sphi 0, %s68
    %s88 = sphi 0, %s90
    %s91 = sphi 0, %s88
    %s92 = sphi 0, %s91
    %s108 = sphi 0, %s92
    %s114 = sphi 0, %s116
    %s117 = sphi 0, %s114
    %s118 = sphi 0, %s117
    %s134 = sphi 0, %s118
  $region4: #{tpu_custom_call.1} parent=0 // loop_header_branch
    %13 = sbr.rel (%p11) target = $region8
  $region5: #{tpu_custom_call.1} parent=0 // loop_body
    %s15 = ssub.s32 %s10, 1
    %s16 = ssub.s32 %s10, 2
    %s17 = sadd.s32 %s10, 1
    %s18 = ssub.s32 %s10, %s17
    %p19 = scmp.eq.s32.totalorder %s18, 0
    %s21 = sadd.s32 %s20, 1
    %s22 = scalar_select %p19, %s20, %s21
    %p25 = pneg %p19
    %p26 = scmp.eq.s32.totalorder %s10, 1
    %p27 = por %p25, %p26
    %p28 = scmp.ne.s32.totalorder %s20, %s23
    %p29 = scmp.eq.s32.totalorder %s10, 0
    %p30 = por %p28, %p29
    %p31 = scmp.ne.s32.totalorder %s20, %s23
    %p32 = scmp.eq.s32.totalorder %s15, 1
    %p33 = por %p31, %p32
    %p34 = scmp.ne.s32.totalorder %s23, %s24
    %p35 = scmp.eq.s32.totalorder %s15, 0
    %p36 = por %p34, %p35
    %p37 = scmp.ne.s32.totalorder %s23, %s24
    %p38 = scmp.eq.s32.totalorder %s16, 1
    %p39 = por %p37, %p38
    %p41 = scmp.ne.s32.totalorder %s24, %s40
    %p42 = scmp.eq.s32.totalorder %s16, 0
    %p43 = por %p41, %p42
    %s45 = sadd.s32 %s44, 1
    %p48 = scmp.eq.s32.totalorder %s10, 1
    %p49 = scmp.ne.s32.totalorder %s44, %s46
    %p50 = scmp.eq.s32.totalorder %s10, 0
    %p51 = por %p49, %p50
    %p52 = scmp.ne.s32.totalorder %s44, %s46
    %p53 = scmp.eq.s32.totalorder %s15, 1
    %p54 = por %p52, %p53
    %p55 = scmp.ne.s32.totalorder %s46, %s47
    %p56 = scmp.eq.s32.totalorder %s15, 0
    %p57 = por %p55, %p56
    %p58 = scmp.ne.s32.totalorder %s46, %s47
    %p59 = scmp.eq.s32.totalorder %s16, 1
    %p60 = por %p58, %p59
    %p62 = scmp.ne.s32.totalorder %s47, %s61
    %p63 = scmp.eq.s32.totalorder %s16, 0
    %p64 = por %p62, %p63
    %s66 = sadd.s32 %s65, 1
    %p69 = scmp.eq.s32.totalorder %s10, 1
    %p70 = scmp.ne.s32.totalorder %s65, %s67
    %p71 = scmp.eq.s32.totalorder %s10, 0
    %p72 = por %p70, %p71
    %p73 = scmp.ne.s32.totalorder %s65, %s67
    %p74 = scmp.eq.s32.totalorder %s15, 1
    %p75 = por %p73, %p74
    %p76 = scmp.ne.s32.totalorder %s67, %s68
    %p77 = scmp.eq.s32.totalorder %s15, 0
    %p78 = por %p76, %p77
    %p79 = scmp.ne.s32.totalorder %s67, %s68
    %p80 = scmp.eq.s32.totalorder %s16, 1
    %p81 = por %p79, %p80
    %p83 = scmp.ne.s32.totalorder %s68, %s82
    %p84 = scmp.eq.s32.totalorder %s16, 0
    %p85 = por %p83, %p84
    %s86 = ssub.s32 %s10, %s17
    %p87 = scmp.eq.s32.totalorder %s86, 0
    %s89 = sadd.s32 %s88, 1
    %s90 = scalar_select %p87, %s88, %s89
    %p93 = pneg %p87
    %p94 = scmp.eq.s32.totalorder %s10, 1
    %p95 = por %p93, %p94
    %p96 = scmp.ne.s32.totalorder %s88, %s91
    %p97 = scmp.eq.s32.totalorder %s10, 0
    %p98 = por %p96, %p97
    %p99 = scmp.ne.s32.totalorder %s88, %s91
    %p100 = scmp.eq.s32.totalorder %s15, 1
    %p101 = por %p99, %p100
    %p102 = scmp.ne.s32.totalorder %s91, %s92
    %p103 = scmp.eq.s32.totalorder %s15, 0
    %p104 = por %p102, %p103
    %p105 = scmp.ne.s32.totalorder %s91, %s92
    %p106 = scmp.eq.s32.totalorder %s16, 1
    %p107 = por %p105, %p106
    %p109 = scmp.ne.s32.totalorder %s92, %s108
    %p110 = scmp.eq.s32.totalorder %s16, 0
    %p111 = por %p109, %p110
    %s112 = ssub.s32 %s10, %s17
    %p113 = scmp.eq.s32.totalorder %s112, 0
    %s115 = sadd.s32 %s114, 1
    %s116 = scalar_select %p113, %s114, %s115
    %p119 = pneg %p113
    %p120 = scmp.eq.s32.totalorder %s10, 1
    %p121 = por %p119, %p120
    %p122 = scmp.ne.s32.totalorder %s114, %s117
    %p123 = scmp.eq.s32.totalorder %s10, 0
    %p124 = por %p122, %p123
    %p125 = scmp.ne.s32.totalorder %s114, %s117
    %p126 = scmp.eq.s32.totalorder %s15, 1
    %p127 = por %p125, %p126
    %p128 = scmp.ne.s32.totalorder %s117, %s118
    %p129 = scmp.eq.s32.totalorder %s15, 0
    %p130 = por %p128, %p129
    %p131 = scmp.ne.s32.totalorder %s117, %s118
    %p132 = scmp.eq.s32.totalorder %s16, 1
    %p133 = por %p131, %p132
    %p135 = scmp.ne.s32.totalorder %s118, %s134
    %p136 = scmp.eq.s32.totalorder %s16, 0
    %p137 = por %p135, %p136
    %p138 = scmp.le.s32.totalorder 1, %s10
    %p139 = scmp.lt.s32.totalorder %s10, 3
    %p140 = pnand %p138, %p139
    %p141 = pneg %p140
    // Predicated region
    $region9: #{tpu_custom_call.1} parent=5 // pred_check
      _
    $region10: #{tpu_custom_call.1} parent=5 // pred_check_branch
      %143 = sbr.rel (%p140) target = $region12
    $region11: #{tpu_custom_call.1} parent=5 // pred_region
      %s144 = ssub.s32 %s10, 1
      // Predicated region
      $region13: #{tpu_custom_call.1} parent=11 // pred_check
        %p145 = pneg %p57
      $region14: #{tpu_custom_call.1} parent=11 // pred_check_branch
        %147 = sbr.rel (%p145) target = $region16
      $region15: #{tpu_custom_call.1} parent=11 // pred_region
        _
      $region16: #{tpu_custom_call.1} parent=11 // pred_fallthru
        _
      // Predicated region
      $region17: #{tpu_custom_call.1} parent=11 // pred_check
        %p148 = pneg %p78
      $region18: #{tpu_custom_call.1} parent=11 // pred_check_branch
        %150 = sbr.rel (%p148) target = $region20
      $region19: #{tpu_custom_call.1} parent=11 // pred_region
        _
      $region20: #{tpu_custom_call.1} parent=11 // pred_fallthru
        _
    $region12: #{tpu_custom_call.1} parent=5 // pred_fallthru
      _
    %p151 = scmp.lt.s32.totalorder %s10, 2
    // Predicated region
    $region21: #{tpu_custom_call.1} parent=5 // pred_check
      %p152 = pneg %p151
    $region22: #{tpu_custom_call.1} parent=5 // pred_check_branch
      %154 = sbr.rel (%p152) target = $region24
    $region23: #{tpu_custom_call.1} parent=5 // pred_region
      // Predicated region
      $region25: #{tpu_custom_call.1} parent=23 // pred_check
        %p155 = pneg %p30
      $region26: #{tpu_custom_call.1} parent=23 // pred_check_branch
        %157 = sbr.rel (%p155) target = $region28
      $region27: #{tpu_custom_call.1} parent=23 // pred_region
        %s158 = smul.u32 8, %s10
        %p159 = scmp.lt.s32.totalorder %s158, 15
        %s160 = scalar_select %p159, %s158, 15
        %s161 = smul.addr %s160, 8
        %s162 = scalar_lea.vmem %s0, %s161
        %s163 = smul.u32 8, %s10
      $region28: #{tpu_custom_call.1} parent=23 // pred_fallthru
        _
      // Predicated region
      $region29: #{tpu_custom_call.1} parent=23 // pred_check
        %p164 = pneg %p98
      $region30: #{tpu_custom_call.1} parent=23 // pred_check_branch
        %166 = sbr.rel (%p164) target = $region32
      $region31: #{tpu_custom_call.1} parent=23 // pred_region
        %s167 = smul.u32 8, %s10
        %p168 = scmp.lt.s32.totalorder %s167, 15
        %s169 = scalar_select %p168, %s167, 15
        %s170 = smul.addr %s169, 8
        %s171 = scalar_lea.vmem %s3, %s170
        %s172 = smul.u32 8, %s10
      $region32: #{tpu_custom_call.1} parent=23 // pred_fallthru
        _
    $region24: #{tpu_custom_call.1} parent=5 // pred_fallthru
      _
    %p173 = scmp.le.s32.totalorder 1, %s10
    %p174 = scmp.lt.s32.totalorder %s10, 3
    %p175 = pnand %p173, %p174
    %p176 = pneg %p175
    // Predicated region
    $region33: #{tpu_custom_call.1} parent=5 // pred_check
      _
    $region34: #{tpu_custom_call.1} parent=5 // pred_check_branch
      %178 = sbr.rel (%p175) target = $region36
    $region35: #{tpu_custom_call.1} parent=5 // pred_region
      %s179 = ssub.s32 %s10, 1
      %s180 = smul.u32 8, %s15
      %p181 = scmp.lt.s32.totalorder %s180, 15
      %s182 = scalar_select %p181, %s180, 15
      %s183 = smul.addr %s182, 8
      %s184 = scalar_lea.vmem %s0, %s183
      %p185 = pneg %p36
      %p186 = pneg %p33
      %p187 = pneg %p57
      %p188 = pneg %p54
      %p189 = pneg %p78
      %p190 = pneg %p75
      %s191 = smul.u32 8, %s15
      %p192 = scmp.lt.s32.totalorder %s191, 15
      %s193 = scalar_select %p192, %s191, 15
      %s194 = smul.addr %s193, 8
      %s195 = scalar_lea.vmem %s3, %s194
      %p196 = pneg %p104
      %p197 = pneg %p101
      %p198 = pneg %p130
      %p199 = pneg %p127
      %s200 = smul.u32 8, %s15
      %p201 = scmp.lt.s32.totalorder %s200, 15
      %s202 = scalar_select %p201, %s200, 15
      %s203 = smul.addr %s202, 8
      %s204 = scalar_lea.vmem %s4, %s203
      %s205 = smul.u32 8, %s15
      %p206 = scmp.lt.s32.totalorder %s205, 15
      %s207 = scalar_select %p206, %s205, 15
      %s208 = smul.addr %s207, 8
      %s209 = scalar_lea.vmem %s0, %s208
      %s210 = smul.u32 8, %s15
      %s211 = smul.u32 8, %s15
      %p212 = scmp.lt.s32.totalorder %s211, 15
      %s213 = scalar_select %p212, %s211, 15
      %s214 = smul.addr %s213, 8
      %s215 = scalar_lea.vmem %s3, %s214
      %s216 = smul.u32 8, %s15
      %s217 = smul.u32 8, %s15
      %p218 = scmp.lt.s32.totalorder %s217, 15
      %s219 = scalar_select %p218, %s217, 15
      %s220 = smul.addr %s219, 8
      %s221 = scalar_lea.vmem %s4, %s220
      %s222 = smul.u32 8, %s15
      %v223 = vld [vmem:[%s209] sm:$0xff]
      %v224 = vld [vmem:[%s209 + $0x8] sm:$0xff]
      %v225 = vld [vmem:[%s209 + $0x10] sm:$0xff]
      %v226 = vld [vmem:[%s209 + $0x18] sm:$0xff]
      %v227 = vld [vmem:[%s209 + $0x20] sm:$0xff]
      %v228 = vld [vmem:[%s209 + $0x28] sm:$0xff]
      %v229 = vld [vmem:[%s209 + $0x30] sm:$0xff]
      %v230 = vld [vmem:[%s209 + $0x38] sm:$0xff]
      %v231 = vld [vmem:[%s1] sm:$0xff]
      %v232 = vld [vmem:[%s1 + $0x8] sm:$0xff]
      %v233 = vld [vmem:[%s1 + $0x10] sm:$0xff]
      %v234 = vld [vmem:[%s1 + $0x18] sm:$0xff]
      %v235 = vld [vmem:[%s2] sm:$0x1]
      %v237 = vlaneseq
      %v238 = vshrl.u32 %v237, 7
      %v239 = vsub.s32 0, %v238
      %v240 = vrot.slane %v235, %v239
      %vm242 = vcmask 261120
      %v244 = vsel %vm242, %v223, 0
      %v247 = vsel %vm242, %v224, 0
      %v250 = vsel %vm242, %v225, 0
      %v253 = vsel %vm242, %v226, 0
      %v256 = vsel %vm242, %v227, 0
      %v259 = vsel %vm242, %v228, 0
      %v262 = vsel %vm242, %v229, 0
      %v265 = vsel %vm242, %v230, 0
      %267 = vmatprep.subr.mxu0 0.0
      %268 = vmatpush1.msra.mxu0 %v231
      %269 = vmatprep.subr.mxu0 0.0
      %270 = vmatpush1.msra.mxu0 %v232
      %271 = vmatprep.subr.mxu0 0.0
      %272 = vmatpush1.msra.mxu0 %v233
      %273 = vmatprep.subr.mxu0 0.0
      %274 = vmatpush1.msra.mxu0 %v234
      %275 = vmatprep.subr.mxu0 0.0
      %276 = vmatpush1.msra.mxu0 0.0
      %277 = vmatprep.subr.mxu0 0.0
      %278 = vmatpush1.msra.mxu0 0.0
      %279 = vmatprep.subr.mxu0 0.0
      %280 = vmatpush1.msra.mxu0 0.0
      %281 = vmatprep.subr.mxu0 0.0
      %282 = vmatpush1.msra.mxu0 0.0
      %283 = vmatprep.subr.mxu0 0.0
      %284 = vmatpush1.msra.mxu0 0.0
      %285 = vmatprep.subr.mxu0 0.0
      %286 = vmatpush1.msra.mxu0 0.0
      %287 = vmatprep.subr.mxu0 0.0
      %288 = vmatpush1.msra.mxu0 0.0
      %289 = vmatprep.subr.mxu0 0.0
      %290 = vmatpush1.msra.mxu0 0.0
      %291 = vmatprep.subr.mxu0 0.0
      %292 = vmatpush1.msra.mxu0 0.0
      %293 = vmatprep.subr.mxu0 0.0
      %294 = vmatpush1.msra.mxu0 0.0
      %295 = vmatprep.subr.mxu0 0.0
      %296 = vmatpush1.msra.mxu0 0.0
      %297 = vmatprep.subr.mxu0 0.0
      %298 = vmatpush1.msra.mxu0 0.0
      %299 = vmatprep.subr.mxu0 0.0
      %300 = vmatpush1.msra.mxu0 0.0
      %301 = vmatprep.subr.mxu0 0.0
      %302 = vmatpush1.msra.mxu0 0.0
      %303 = vmatprep.subr.mxu0 0.0
      %304 = vmatpush1.msra.mxu0 0.0
      %305 = vmatprep.subr.mxu0 0.0
      %306 = vmatpush1.msra.mxu0 0.0
      %307 = vmatprep.subr.mxu0 0.0
      %308 = vmatpush1.msra.mxu0 0.0
      %309 = vmatprep.subr.mxu0 0.0
      %310 = vmatpush1.msra.mxu0 0.0
      %311 = vmatprep.subr.mxu0 0.0
      %312 = vmatpush1.msra.mxu0 0.0
      %313 = vmatprep.subr.mxu0 0.0
      %314 = vmatpush1.msra.mxu0 0.0
      %315 = vmatprep.subr.mxu0 0.0
      %316 = vmatpush1.msra.mxu0 0.0
      %317 = vmatprep.subr.mxu0 0.0
      %318 = vmatpush1.msra.mxu0 0.0
      %319 = vmatprep.subr.mxu0 0.0
      %320 = vmatpush1.msra.mxu0 0.0
      %321 = vmatprep.subr.mxu0 0.0
      %322 = vmatpush1.msra.mxu0 0.0
      %323 = vmatprep.subr.mxu0 0.0
      %324 = vmatpush1.msra.mxu0 0.0
      %325 = vmatprep.subr.mxu0 0.0
      %326 = vmatpush1.msra.mxu0 0.0
      %327 = vmatprep.subr.mxu0 0.0
      %328 = vmatpush1.msra.mxu0 0.0
      %329 = vmatprep.subr.mxu0 0.0
      %330 = vmatpush1.msra.mxu0 0.0
      %331 = vmatprep.mubr.f32.mxu0 0.0
      %332 = vmatmul.mubr.f32.gmra.mrb[0].mxu0 %v244
      %v333 = vpop.f32.mrb[0].mxu0
      %v334 = vadd.f32 %v240, %v333
      %v335 = vpop.f32.mrb[0].mxu0
      %336 = vmatprep.mubr.f32.mxu0 0.0
      %337 = vmatmul.mubr.f32.gmra.mrb[0].mxu0 %v247
      %v338 = vpop.f32.mrb[0].mxu0
      %v339 = vadd.f32 %v240, %v338
      %v340 = vpop.f32.mrb[0].mxu0
      %341 = vmatprep.mubr.f32.mxu0 0.0
      %342 = vmatmul.mubr.f32.gmra.mrb[0].mxu0 %v250
      %v343 = vpop.f32.mrb[0].mxu0
      %v344 = vadd.f32 %v240, %v343
      %v345 = vpop.f32.mrb[0].mxu0
      %346 = vmatprep.mubr.f32.mxu0 0.0
      %347 = vmatmul.mubr.f32.gmra.mrb[0].mxu0 %v253
      %v348 = vpop.f32.mrb[0].mxu0
      %v349 = vadd.f32 %v240, %v348
      %v350 = vpop.f32.mrb[0].mxu0
      %351 = vmatprep.mubr.f32.mxu0 0.0
      %352 = vmatmul.mubr.f32.gmra.mrb[0].mxu0 %v256
      %v353 = vpop.f32.mrb[0].mxu0
      %v354 = vadd.f32 %v240, %v353
      %v355 = vpop.f32.mrb[0].mxu0
      %356 = vmatprep.mubr.f32.mxu0 0.0
      %357 = vmatmul.mubr.f32.gmra.mrb[0].mxu0 %v259
      %v358 = vpop.f32.mrb[0].mxu0
      %v359 = vadd.f32 %v240, %v358
      %v360 = vpop.f32.mrb[0].mxu0
      %361 = vmatprep.mubr.f32.mxu0 0.0
      %362 = vmatmul.mubr.f32.gmra.mrb[0].mxu0 %v262
      %v363 = vpop.f32.mrb[0].mxu0
      %v364 = vadd.f32 %v240, %v363
      %v365 = vpop.f32.mrb[0].mxu0
      %366 = vmatprep.mubr.f32.mxu0 0.0
      %367 = vmatmul.mubr.f32.gmra.mrb[0].mxu0 %v265
      %v368 = vpop.f32.mrb[0].mxu0
      %v369 = vadd.f32 %v240, %v368
      %v370 = vpop.f32.mrb[0].mxu0
      %371 = vdwg.mxu0
      %v372 = vmax.f32 %v334, 0.0
      %v373 = vmax.f32 %v339, 0.0
      %v374 = vmax.f32 %v344, 0.0
      %v375 = vmax.f32 %v349, 0.0
      %v376 = vmax.f32 %v354, 0.0
      %v377 = vmax.f32 %v359, 0.0
      %v378 = vmax.f32 %v364, 0.0
      %v379 = vmax.f32 %v369, 0.0
      %v380 = vmul.f32 %v372, 1.442695
      %v381 = vpow.pop %v380
      %v382 = vmul.f32 %v373, 1.442695
      %v383 = vpow.pop %v382
      %v384 = vmul.f32 %v374, 1.442695
      %v385 = vpow.pop %v384
      %v386 = vmul.f32 %v375, 1.442695
      %v387 = vpow.pop %v386
      %v388 = vmul.f32 %v376, 1.442695
      %v389 = vpow.pop %v388
      %v390 = vmul.f32 %v377, 1.442695
      %v391 = vpow.pop %v390
      %v392 = vmul.f32 %v378, 1.442695
      %v393 = vpow.pop %v392
      %v394 = vmul.f32 %v379, 1.442695
      %v395 = vpow.pop %v394
      %v396 = vld [vmem:[%s215] sm:$0xff]
      %v397 = vld [vmem:[%s215 + $0x8] sm:$0xff]
      %v398 = vld [vmem:[%s215 + $0x10] sm:$0xff]
      %v399 = vld [vmem:[%s215 + $0x18] sm:$0xff]
      %v400 = vld [vmem:[%s215 + $0x20] sm:$0xff]
      %v401 = vld [vmem:[%s215 + $0x28] sm:$0xff]
      %v402 = vld [vmem:[%s215 + $0x30] sm:$0xff]
      %v403 = vld [vmem:[%s215 + $0x38] sm:$0xff]
      %412 = vrot.lane.b32.xlu0 %v381, 96
      %v413 = vpop.permute.xlu0 %412
      %414 = vrot.lane.b32.xlu0 %v383, 96
      %v415 = vpop.permute.xlu0 %414
      %416 = vrot.lane.b32.xlu0 %v385, 96
      %v417 = vpop.permute.xlu0 %416
      %418 = vrot.lane.b32.xlu0 %v387, 96
      %v419 = vpop.permute.xlu0 %418
      %420 = vrot.lane.b32.xlu0 %v389, 96
      %v421 = vpop.permute.xlu0 %420
      %422 = vrot.lane.b32.xlu0 %v391, 96
      %v423 = vpop.permute.xlu0 %422
      %424 = vrot.lane.b32.xlu0 %v393, 96
      %v425 = vpop.permute.xlu0 %424
      %426 = vrot.lane.b32.xlu0 %v395, 96
      %v427 = vpop.permute.xlu0 %426
      %v436 = vmul.f32 %v396, %v413
      %v437 = vmul.f32 %v397, %v415
      %v438 = vmul.f32 %v398, %v417
      %v439 = vmul.f32 %v399, %v419
      %v440 = vmul.f32 %v400, %v421
      %v441 = vmul.f32 %v401, %v423
      %v442 = vmul.f32 %v402, %v425
      %v443 = vmul.f32 %v403, %v427
      %v444 = vadd.f32 %v436, %v372
      %v445 = vadd.f32 %v437, %v373
      %v446 = vadd.f32 %v438, %v374
      %v447 = vadd.f32 %v439, %v375
      %v448 = vadd.f32 %v440, %v376
      %v449 = vadd.f32 %v441, %v377
      %v450 = vadd.f32 %v442, %v378
      %v451 = vadd.f32 %v443, %v379
      %v452 = vmul.f32 %v381, %v381
      %v453 = vmul.f32 %v383, %v383
      %v454 = vmul.f32 %v385, %v385
      %v455 = vmul.f32 %v387, %v387
      %v456 = vmul.f32 %v389, %v389
      %v457 = vmul.f32 %v391, %v391
      %v458 = vmul.f32 %v393, %v393
      %v459 = vmul.f32 %v395, %v395
      %v460 = vmul.f32 %v372, %v372
      %v461 = vmul.f32 %v373, %v373
      %v462 = vmul.f32 %v374, %v374
      %v463 = vmul.f32 %v375, %v375
      %v464 = vmul.f32 %v376, %v376
      %v465 = vmul.f32 %v377, %v377
      %v466 = vmul.f32 %v378, %v378
      %v467 = vmul.f32 %v379, %v379
      %476 = vrot.lane.b32.xlu0 %v460, 32
      %v477 = vpop.permute.xlu0 %476
      %478 = vrot.lane.b32.xlu0 %v461, 32
      %v479 = vpop.permute.xlu0 %478
      %480 = vrot.lane.b32.xlu0 %v462, 32
      %v481 = vpop.permute.xlu0 %480
      %482 = vrot.lane.b32.xlu0 %v463, 32
      %v483 = vpop.permute.xlu0 %482
      %484 = vrot.lane.b32.xlu0 %v464, 32
      %v485 = vpop.permute.xlu0 %484
      %486 = vrot.lane.b32.xlu0 %v465, 32
      %v487 = vpop.permute.xlu0 %486
      %488 = vrot.lane.b32.xlu0 %v466, 32
      %v489 = vpop.permute.xlu0 %488
      %490 = vrot.lane.b32.xlu0 %v467, 32
      %v491 = vpop.permute.xlu0 %490
      %v500 = vadd.f32 %v452, %v477
      %v501 = vadd.f32 %v453, %v479
      %v502 = vadd.f32 %v454, %v481
      %v503 = vadd.f32 %v455, %v483
      %v504 = vadd.f32 %v456, %v485
      %v505 = vadd.f32 %v457, %v487
      %v506 = vadd.f32 %v458, %v489
      %v507 = vadd.f32 %v459, %v491
      %v508 = vsub.f32 %v500, %v372
      %v509 = vsub.f32 %v501, %v373
      %v510 = vsub.f32 %v502, %v374
      %v511 = vsub.f32 %v503, %v375
      %v512 = vsub.f32 %v504, %v376
      %v513 = vsub.f32 %v505, %v377
      %v514 = vsub.f32 %v506, %v378
      %v515 = vsub.f32 %v507, %v379
      %v516 = vsub.f32 %v508, 0.5
      %v517 = vsub.f32 %v509, 0.5
      %v518 = vsub.f32 %v510, 0.5
      %v519 = vsub.f32 %v511, 0.5
      %v520 = vsub.f32 %v512, 0.5
      %v521 = vsub.f32 %v513, 0.5
      %v522 = vsub.f32 %v514, 0.5
      %v523 = vsub.f32 %v515, 0.5
      %v524 = vsel %vm242, %v444, %v516
      %v525 = vsel %vm242, %v445, %v517
      %v526 = vsel %vm242, %v446, %v518
      %v527 = vsel %vm242, %v447, %v519
      %v528 = vsel %vm242, %v448, %v520
      %v529 = vsel %vm242, %v449, %v521
      %v530 = vsel %vm242, %v450, %v522
      %v531 = vsel %vm242, %v451, %v523
      %vm532 = vcmask 523264
      %533 = vst.msk [vmem:[%s221] sm:$0xff] %vm532, %v524
      %534 = vst.msk [vmem:[%s221 + $0x8] sm:$0xff] %vm532, %v525
      %535 = vst.msk [vmem:[%s221 + $0x10] sm:$0xff] %vm532, %v526
      %536 = vst.msk [vmem:[%s221 + $0x18] sm:$0xff] %vm532, %v527
      %537 = vst.msk [vmem:[%s221 + $0x20] sm:$0xff] %vm532, %v528
      %538 = vst.msk [vmem:[%s221 + $0x28] sm:$0xff] %vm532, %v529
      %539 = vst.msk [vmem:[%s221 + $0x30] sm:$0xff] %vm532, %v530
      %540 = vst.msk [vmem:[%s221 + $0x38] sm:$0xff] %vm532, %v531
      %s541 = smul.u32 8, %s15
      %p542 = scmp.lt.s32.totalorder %s541, 15
      %s543 = scalar_select %p542, %s541, 15
      %s544 = smul.addr %s543, 8
      %s545 = scalar_lea.vmem %s4, %s544
      // Predicated region
      $region37: #{tpu_custom_call.1} parent=35 // pred_check
        %p546 = pneg %p127
      $region38: #{tpu_custom_call.1} parent=35 // pred_check_branch
        %548 = sbr.rel (%p546) target = $region40
      $region39: #{tpu_custom_call.1} parent=35 // pred_region
        %s549 = smul.u32 8, %s15
      $region40: #{tpu_custom_call.1} parent=35 // pred_fallthru
        _
    $region36: #{tpu_custom_call.1} parent=5 // pred_fallthru
      _
    %p550 = scmp.le.s32.totalorder 2, %s10
    // Predicated region
    $region41: #{tpu_custom_call.1} parent=5 // pred_check
      %p551 = pneg %p550
    $region42: #{tpu_custom_call.1} parent=5 // pred_check_branch
      %553 = sbr.rel (%p551) target = $region44
    $region43: #{tpu_custom_call.1} parent=5 // pred_region
      %s554 = ssub.s32 %s10, 2
      // Predicated region
      $region45: #{tpu_custom_call.1} parent=43 // pred_check
        %p555 = pneg %p133
      $region46: #{tpu_custom_call.1} parent=43 // pred_check_branch
        %557 = sbr.rel (%p555) target = $region48
      $region47: #{tpu_custom_call.1} parent=43 // pred_region
        %s558 = smul.u32 8, %s16
        %p559 = scmp.lt.s32.totalorder %s558, 15
        %s560 = scalar_select %p559, %s558, 15
        %s561 = smul.addr %s560, 8
        %s562 = scalar_lea.vmem %s4, %s561
      $region48: #{tpu_custom_call.1} parent=43 // pred_fallthru
        _
    $region44: #{tpu_custom_call.1} parent=5 // pred_fallthru
      _
  $region6: #{tpu_custom_call.1} parent=0 // loop_footer
    %s14 = sadd.s32 1, %s10
  $region7: #{tpu_custom_call.1} parent=0 // loop_footer_branch
    %9 = sbr.rel target = $region3
  $region8: #{tpu_custom_call.1} parent=0 // loop_exit
    _

</llo_original>
